<compile_context>
chip_gen: v7x
topology: tpu7x:2x2x1
jax: 0.10.0
libtpu: 0.0.40
codegen_flags: <defaults>
</compile_context>

<pallas_src>
import functools

import jax
import jax.numpy as jnp
from jax import lax
from jax.experimental import pallas as pl
from jax.experimental.pallas import tpu as pltpu

_LANE = 128
_SUBLANE = 8


def _round_up(n, m):
    return ((n + m - 1) // m) * m


def _choose_batch_tile(batch):
    """Batch-tile heuristic.

    Tiny batches -> a single program (tile = batch rounded to a sublane
    multiple).  Otherwise aim for >= 2 programs (v7x megacore shards the
    'parallel' batch axis across its 2 TensorCores) with tiles capped at
    1024 rows so the ~0.35us per-grid-step overhead is amortised on the
    single-TensorCore v5e / v6e.
    """
    if batch <= 32:
        return _round_up(batch, _SUBLANE)
    return min(1024, _round_up(pl.cdiv(batch, 2), 16))


def _mlp_kernel(num_hidden_layers, n_output, compute_dtype, *refs):
    """Fused (linear+relu) x L, final linear + lane-masked softmax."""
    if num_hidden_layers > 1:
        (x_ref, w_in_ref, b_in_ref, w_h_ref, b_h_ref,
         w_out_ref, b_out_ref, o_ref) = refs
    else:
        x_ref, w_in_ref, b_in_ref, w_out_ref, b_out_ref, o_ref = refs
        w_h_ref = b_h_ref = None

    # Input layer + ReLU (dropout = identity at eval). MXU in compute_dtype,
    # accumulation + bias + ReLU in f32.
    x = x_ref[...].astype(compute_dtype)
    h = jnp.dot(x, w_in_ref[...], preferred_element_type=jnp.float32)
    h = jnp.maximum(h + b_in_ref[...], 0.0)

    # Hidden layers (statically unrolled over the stacked weights).
    for i in range(num_hidden_layers - 1):
        h = jnp.dot(h.astype(compute_dtype), w_h_ref[i],
                    preferred_element_type=jnp.float32)
        h = jnp.maximum(h + b_h_ref[i], 0.0)

    # Output layer.
    z = jnp.dot(h.astype(compute_dtype), w_out_ref[...],
                preferred_element_type=jnp.float32)
    z = z + b_out_ref[...]

    # Numerically stable softmax over the REAL output lanes only.  Padded
    # lanes are excluded via an explicit lane mask, and the normalisation is
    # an exact divide (approx reciprocal previously broke the row-sum check).
    lane = lax.broadcasted_iota(jnp.int32, z.shape, 1)
    valid = lane < n_output
    m = jnp.max(jnp.where(valid, z, -1e30), axis=-1, keepdims=True)
    e = jnp.where(valid, jnp.exp(z - m), 0.0)
    o_ref[...] = (e / jnp.sum(e, axis=-1, keepdims=True)).astype(o_ref.dtype)


def pad_class_mlp_params(params, num_hidden_layers, compute_dtype=jnp.bfloat16):
    """One-time weight prep.

    * feature dim F is left un-padded (a block equal to the full dim is
      legal; padding 45->128 would inflate the dominant x read stream 2.7x).
    * hidden dim is padded to a lane multiple (128) so activations stay
      lane-dense.  TODO(synk): pad to 256 if n_hidden ever exceeds 128
      (v6e/v7x MXUs are 256 wide).
    * output dim is padded only to a sublane multiple (8), not 128 — the
      output slab is the largest HBM write stream.
    * weights go to compute_dtype (bf16 halves resident bytes); biases stay
      f32 (added after the f32 MXU accumulation).
    """
    F, H = params["w_in"].shape
    O = params["w_out"].shape[1]
    H_pad = _round_up(H, _LANE)
    O_pad = _round_up(O, _SUBLANE)

    padded = {
        "w_in": jnp.pad(params["w_in"],
                        ((0, 0), (0, H_pad - H))).astype(compute_dtype),
        "b_in": jnp.pad(params["b_in"],
                        ((0, 0), (0, H_pad - H))).astype(jnp.float32),
        "w_out": jnp.pad(params["w_out"],
                         ((0, H_pad - H), (0, O_pad - O))).astype(compute_dtype),
        "b_out": jnp.pad(params["b_out"],
                         ((0, 0), (0, O_pad - O))).astype(jnp.float32),
    }
    if num_hidden_layers > 1:
        padded["w_h"] = jnp.pad(
            params["w_h"],
            ((0, 0), (0, H_pad - H), (0, H_pad - H))).astype(compute_dtype)
        padded["b_h"] = jnp.pad(
            params["b_h"], ((0, 0), (0, 0), (0, H_pad - H))).astype(jnp.float32)
    return padded


def class_mlp_forward(x, padded_params, *, num_hidden_layers, n_output,
                      batch_tile=None, vmem_limit_bytes=32 * 1024 * 1024):
    """class_MLP forward pass (eval mode) via a fused Pallas TPU kernel.

    x:             (B, n_feature) float32 (unpadded)
    padded_params: output of pad_class_mlp_params
    Returns (B, n_output) float32 softmax probabilities.
    """
    B, F = x.shape
    compute_dtype = padded_params["w_in"].dtype
    F_w, H_pad = padded_params["w_in"].shape
    assert F_w == F, "x feature dim must match w_in's first dim"
    O_pad = padded_params["w_out"].shape[1]
    Lm1 = num_hidden_layers - 1

    tb = batch_tile if batch_tile is not None else _choose_batch_tile(B)
    B_pad = _round_up(B, tb)
    grid = (B_pad // tb,)

    # x keeps its HBM dtype/feature width; only the batch gets zero-padded,
    # and only when the tile doesn't divide it (no full pad/cast pre-pass).
    x_in = x if B_pad == B else jnp.pad(x, ((0, B_pad - B), (0, 0)))

    in_specs = [
        pl.BlockSpec((tb, F), lambda i: (i, 0)),          # x (tiled on batch)
        pl.BlockSpec((F, H_pad), lambda i: (0, 0)),       # w_in   (resident)
        pl.BlockSpec((1, H_pad), lambda i: (0, 0)),       # b_in
    ]
    args = [x_in, padded_params["w_in"], padded_params["b_in"]]
    if num_hidden_layers > 1:
        in_specs += [
            pl.BlockSpec((Lm1, H_pad, H_pad), lambda i: (0, 0, 0)),  # w_h stack
            pl.BlockSpec((Lm1, 1, H_pad), lambda i: (0, 0, 0)),      # b_h stack
        ]
        args += [padded_params["w_h"], padded_params["b_h"]]
    in_specs += [
        pl.BlockSpec((H_pad, O_pad), lambda i: (0, 0)),   # w_out
        pl.BlockSpec((1, O_pad), lambda i: (0, 0)),       # b_out
    ]
    args += [padded_params["w_out"], padded_params["b_out"]]

    # VMEM guard (matters on v7x's 64 MiB/TC): blocks are double-buffered by
    # the pipeline, plus a rough allowance for the f32 activation temps.
    weight_bytes = sum(int(a.size) * a.dtype.itemsize for a in args[1:])
    resident = (2 * (tb * F * x.dtype.itemsize + tb * O_pad * 4)
                + 2 * weight_bytes + 4 * tb * H_pad * 4)
    if resident > vmem_limit_bytes:
        raise ValueError(
            f"estimated VMEM footprint {resident} B exceeds the limit of "
            f"{vmem_limit_bytes} B; reduce batch_tile or tile the hidden "
            f"layer stack over a second grid axis")

    flops = 2 * B_pad * (F * H_pad + max(Lm1, 0) * H_pad * H_pad
                         + H_pad * O_pad)
    bytes_accessed = int(B_pad * F * x.dtype.itemsize + weight_bytes
                         + B_pad * O_pad * 4)
    cost = pl.CostEstimate(flops=int(flops),
                           transcendentals=int(B_pad * O_pad),
                           bytes_accessed=bytes_accessed)

    kernel = functools.partial(_mlp_kernel, num_hidden_layers, n_output,
                               compute_dtype)

    out = pl.pallas_call(
        kernel,
        out_shape=jax.ShapeDtypeStruct((B_pad, O_pad), jnp.float32),
        grid_spec=pl.GridSpec(
            grid=grid,
            in_specs=in_specs,
            out_specs=pl.BlockSpec((tb, O_pad), lambda i: (i, 0)),
        ),
        compiler_params=pltpu.CompilerParams(
            dimension_semantics=("parallel",),
            vmem_limit_bytes=vmem_limit_bytes),
        cost_estimate=cost,
    )(*args)

    return out[:B, :n_output]


def _init_linear(key, fan_in, fan_out):
    """PyTorch-style U(-1/sqrt(fan_in), 1/sqrt(fan_in)) init (deterministic)."""
    k_w, k_b = jax.random.split(key)
    bound = 1.0 / (fan_in ** 0.5)
    w = jax.random.uniform(k_w, (fan_in, fan_out), jnp.float32, -bound, bound)
    b = jax.random.uniform(k_b, (1, fan_out), jnp.float32, -bound, bound)
    return w, b


def init_class_mlp_params(key, n_feature, n_hidden, n_output, num_hidden_layers):
    keys = jax.random.split(key, num_hidden_layers + 1)
    w_in, b_in = _init_linear(keys[0], n_feature, n_hidden)
    params = {"w_in": w_in, "b_in": b_in}
    if num_hidden_layers > 1:
        ws, bs = [], []
        for i in range(num_hidden_layers - 1):
            w, b = _init_linear(keys[1 + i], n_hidden, n_hidden)
            ws.append(w)
            bs.append(b)
        params["w_h"] = jnp.stack(ws, axis=0)   # (L-1, H, H)
        params["b_h"] = jnp.stack(bs, axis=0)   # (L-1, 1, H)
    w_out, b_out = _init_linear(keys[-1], n_hidden, n_output)
    params["w_out"] = w_out
    params["b_out"] = b_out
    return params


def _reference_forward(x, params, num_hidden_layers):
    h = jnp.maximum(x @ params["w_in"] + params["b_in"], 0.0)
    for i in range(num_hidden_layers - 1):
        h = jnp.maximum(h @ params["w_h"][i] + params["b_h"][i], 0.0)
    z = h @ params["w_out"] + params["b_out"]
    return jax.nn.softmax(z, axis=1)


if __name__ == "__main__":
    # Shapes consistent with the module's intended use: pooled inputs are
    # (batch, 3 masses + 21 orbital means + 21 orbital stds) = (B, 45).
    B = 8
    n_feature = 45
    n_hidden = 32
    n_output = 3
    num_hidden_layers = 3   # input layer + 2 hidden layers + predict
    dropout_p = 0.1         # unused at eval time (dropout = identity)

    root = jax.random.PRNGKey(0)
    k_params, k_x, k_x2 = jax.random.split(root, 3)
    params = init_class_mlp_params(
        k_params, n_feature, n_hidden, n_output, num_hidden_layers)
    x = jax.random.normal(k_x, (B, n_feature), jnp.float32)
    y_ref = _reference_forward(x, params, num_hidden_layers)

    # f32 compute path: tight check against the pure-JAX reference.
    pp_f32 = pad_class_mlp_params(params, num_hidden_layers,
                                  compute_dtype=jnp.float32)
    y_f32 = jax.block_until_ready(
        class_mlp_forward(x, pp_f32, num_hidden_layers=num_hidden_layers,
                          n_output=n_output))
    assert y_f32.shape == (B, n_output)
    assert jnp.allclose(jnp.sum(y_f32, axis=1), 1.0, atol=1e-3)
    assert jnp.allclose(y_f32, y_ref, atol=1e-4, rtol=1e-4)

    # Multi-program grid + ragged-batch padding path (tb=32, grid=(2,)).
    B2 = 40
    x2 = jax.random.normal(k_x2, (B2, n_feature), jnp.float32)
    y2 = jax.block_until_ready(
        class_mlp_forward(x2, pp_f32, num_hidden_layers=num_hidden_layers,
                          n_output=n_output))
    assert y2.shape == (B2, n_output)
    assert jnp.allclose(y2, _reference_forward(x2, params, num_hidden_layers),
                        atol=1e-4, rtol=1e-4)

    # Single-hidden-layer configuration (no stacked hidden-weight input).
    params1 = init_class_mlp_params(k_params, n_feature, n_hidden, n_output, 1)
    pp1 = pad_class_mlp_params(params1, 1, compute_dtype=jnp.float32)
    y1 = jax.block_until_ready(
        class_mlp_forward(x, pp1, num_hidden_layers=1, n_output=n_output))
    assert jnp.allclose(y1, _reference_forward(x, params1, 1),
                        atol=1e-4, rtol=1e-4)

    # bf16 compute path (MXU-native weights, f32 accumulation): loose check.
    pp_bf16 = pad_class_mlp_params(params, num_hidden_layers,
                                   compute_dtype=jnp.bfloat16)
    y_bf16 = jax.block_until_ready(
        class_mlp_forward(x, pp_bf16, num_hidden_layers=num_hidden_layers,
                          n_output=n_output))
    assert y_bf16.shape == (B, n_output)
    assert jnp.allclose(jnp.sum(y_bf16, axis=1), 1.0, atol=1e-3)
    assert jnp.allclose(y_bf16, y_ref, atol=5e-2)

    print("KERNEL_OK")
</pallas_src>

<mosaic_0001>
module attributes {stable_mosaic.version = 11 : i64} {
  func.func @_mlp_kernel(%arg0: i32, %arg1: memref<8x45xf32, #tpu.memory_space<vmem>>, %arg2: memref<45x128xf32, #tpu.memory_space<vmem>>, %arg3: memref<1x128xf32, #tpu.memory_space<vmem>>, %arg4: memref<2x128x128xf32, #tpu.memory_space<vmem>>, %arg5: memref<2x1x128xf32, #tpu.memory_space<vmem>>, %arg6: memref<128x8xf32, #tpu.memory_space<vmem>>, %arg7: memref<1x8xf32, #tpu.memory_space<vmem>>, %arg8: memref<8x8xf32, #tpu.memory_space<vmem>>) attributes {dimension_semantics = [#tpu.dimension_semantics<parallel>], iteration_bounds = array<i64: 1>, scalar_prefetch = 0 : i64, scratch_operands = 0 : i64, tpu.core_type = #tpu.core_type<tc>, window_params = [{transform_indices = @transform_0, window_bounds = array<i64: 8, 45>}, {pipeline_mode = #tpu.pipeline_mode<synchronous>, transform_indices = @transform_1, window_bounds = array<i64: 45, 128>}, {pipeline_mode = #tpu.pipeline_mode<synchronous>, transform_indices = @transform_2, window_bounds = array<i64: 1, 128>}, {pipeline_mode = #tpu.pipeline_mode<synchronous>, transform_indices = @transform_3, window_bounds = array<i64: 2, 128, 128>}, {pipeline_mode = #tpu.pipeline_mode<synchronous>, transform_indices = @transform_4, window_bounds = array<i64: 2, 1, 128>}, {pipeline_mode = #tpu.pipeline_mode<synchronous>, transform_indices = @transform_5, window_bounds = array<i64: 128, 8>}, {pipeline_mode = #tpu.pipeline_mode<synchronous>, transform_indices = @transform_6, window_bounds = array<i64: 1, 8>}, {transform_indices = @transform_7, window_bounds = array<i64: 8, 8>}]} {
    %c0 = arith.constant 0 : index
    %c0_0 = arith.constant 0 : index
    %0 = vector.load %arg1[%c0, %c0_0] : memref<8x45xf32, #tpu.memory_space<vmem>>, vector<8x45xf32>
    %c0_1 = arith.constant 0 : index
    %c0_2 = arith.constant 0 : index
    %1 = vector.load %arg2[%c0_1, %c0_2] : memref<45x128xf32, #tpu.memory_space<vmem>>, vector<45x128xf32>
    %cst = arith.constant dense<0.000000e+00> : vector<8x128xf32>
    %2 = tpu.matmul %0, %1, %cst {dimension_numbers = #tpu.dot_dimension_numbers<[1], [0], [0], [1], [0, 0, 1, 1], [], []>} : vector<8x45xf32>, vector<45x128xf32>, vector<8x128xf32> -> vector<8x128xf32>
    %c0_3 = arith.constant 0 : index
    %c0_4 = arith.constant 0 : index
    %3 = vector.load %arg3[%c0_3, %c0_4] : memref<1x128xf32, #tpu.memory_space<vmem>>, vector<1x128xf32>
    %4 = vector.broadcast %3 : vector<1x128xf32> to vector<8x128xf32>
    %5 = arith.addf %2, %4 : vector<8x128xf32>
    %cst_5 = arith.constant 0.000000e+00 : f32
    %6 = vector.broadcast %cst_5 : f32 to vector<8x128xf32>
    %7 = arith.maximumf %5, %6 : vector<8x128xf32>
    %c0_6 = arith.constant 0 : index
    %c0_7 = arith.constant 0 : index
    %c0_8 = arith.constant 0 : index
    %8 = vector.load %arg4[%c0_6, %c0_7, %c0_8] : memref<2x128x128xf32, #tpu.memory_space<vmem>>, vector<1x128x128xf32>
    %9 = vector.shape_cast %8 : vector<1x128x128xf32> to vector<128x128xf32>
    %cst_9 = arith.constant dense<0.000000e+00> : vector<8x128xf32>
    %10 = tpu.matmul %7, %9, %cst_9 {dimension_numbers = #tpu.dot_dimension_numbers<[1], [0], [0], [1], [0, 0, 1, 1], [], []>} : vector<8x128xf32>, vector<128x128xf32>, vector<8x128xf32> -> vector<8x128xf32>
    %c0_10 = arith.constant 0 : index
    %c0_11 = arith.constant 0 : index
    %c0_12 = arith.constant 0 : index
    %11 = vector.load %arg5[%c0_10, %c0_11, %c0_12] : memref<2x1x128xf32, #tpu.memory_space<vmem>>, vector<1x1x128xf32>
    %12 = vector.shape_cast %11 : vector<1x1x128xf32> to vector<1x128xf32>
    %13 = vector.broadcast %12 : vector<1x128xf32> to vector<8x128xf32>
    %14 = arith.addf %10, %13 : vector<8x128xf32>
    %cst_13 = arith.constant 0.000000e+00 : f32
    %15 = vector.broadcast %cst_13 : f32 to vector<8x128xf32>
    %16 = arith.maximumf %14, %15 : vector<8x128xf32>
    %c1 = arith.constant 1 : index
    %c0_14 = arith.constant 0 : index
    %c0_15 = arith.constant 0 : index
    %17 = vector.load %arg4[%c1, %c0_14, %c0_15] : memref<2x128x128xf32, #tpu.memory_space<vmem>>, vector<1x128x128xf32>
    %18 = vector.shape_cast %17 : vector<1x128x128xf32> to vector<128x128xf32>
    %cst_16 = arith.constant dense<0.000000e+00> : vector<8x128xf32>
    %19 = tpu.matmul %16, %18, %cst_16 {dimension_numbers = #tpu.dot_dimension_numbers<[1], [0], [0], [1], [0, 0, 1, 1], [], []>} : vector<8x128xf32>, vector<128x128xf32>, vector<8x128xf32> -> vector<8x128xf32>
    %c1_17 = arith.constant 1 : index
    %c0_18 = arith.constant 0 : index
    %c0_19 = arith.constant 0 : index
    %20 = vector.load %arg5[%c1_17, %c0_18, %c0_19] : memref<2x1x128xf32, #tpu.memory_space<vmem>>, vector<1x1x128xf32>
    %21 = vector.shape_cast %20 : vector<1x1x128xf32> to vector<1x128xf32>
    %22 = vector.broadcast %21 : vector<1x128xf32> to vector<8x128xf32>
    %23 = arith.addf %19, %22 : vector<8x128xf32>
    %cst_20 = arith.constant 0.000000e+00 : f32
    %24 = vector.broadcast %cst_20 : f32 to vector<8x128xf32>
    %25 = arith.maximumf %23, %24 : vector<8x128xf32>
    %c0_21 = arith.constant 0 : index
    %c0_22 = arith.constant 0 : index
    %26 = vector.load %arg6[%c0_21, %c0_22] : memref<128x8xf32, #tpu.memory_space<vmem>>, vector<128x8xf32>
    %cst_23 = arith.constant dense<0.000000e+00> : vector<8x8xf32>
    %27 = tpu.matmul %25, %26, %cst_23 {dimension_numbers = #tpu.dot_dimension_numbers<[1], [0], [0], [1], [0, 0, 1, 1], [], []>} : vector<8x128xf32>, vector<128x8xf32>, vector<8x8xf32> -> vector<8x8xf32>
    %c0_24 = arith.constant 0 : index
    %c0_25 = arith.constant 0 : index
    %28 = vector.load %arg7[%c0_24, %c0_25] : memref<1x8xf32, #tpu.memory_space<vmem>>, vector<1x8xf32>
    %29 = vector.broadcast %28 : vector<1x8xf32> to vector<8x8xf32>
    %30 = arith.addf %27, %29 : vector<8x8xf32>
    %31 = tpu.iota {dimensions = array<i32: 1>} : vector<8x8xi32>
    %c3_i32 = arith.constant 3 : i32
    %32 = vector.broadcast %c3_i32 : i32 to vector<8x8xi32>
    %33 = arith.cmpi slt, %31, %32 : vector<8x8xi32>
    %cst_26 = arith.constant -1.000000e+30 : f32
    %34 = vector.broadcast %cst_26 : f32 to vector<8x8xf32>
    %35 = arith.select %33, %30, %34 : vector<8x8xi1>, vector<8x8xf32>
    %cst_27 = arith.constant dense<0xFF800000> : vector<8xf32>
    %36 = vector.multi_reduction <maximumf>, %35, %cst_27 [1] : vector<8x8xf32> to vector<8xf32>
    %37 = vector.shape_cast %36 : vector<8xf32> to vector<8x1xf32>
    %38 = vector.broadcast %37 : vector<8x1xf32> to vector<8x8xf32>
    %39 = arith.subf %30, %38 : vector<8x8xf32>
    %40 = math.exp %39 : vector<8x8xf32>
    %cst_28 = arith.constant 0.000000e+00 : f32
    %41 = vector.broadcast %cst_28 : f32 to vector<8x8xf32>
    %42 = arith.select %33, %40, %41 : vector<8x8xi1>, vector<8x8xf32>
    %cst_29 = arith.constant dense<0.000000e+00> : vector<8xf32>
    %43 = vector.multi_reduction <add>, %42, %cst_29 [1] : vector<8x8xf32> to vector<8xf32>
    %44 = vector.shape_cast %43 : vector<8xf32> to vector<8x1xf32>
    %45 = vector.broadcast %44 : vector<8x1xf32> to vector<8x8xf32>
    %46 = arith.divf %42, %45 : vector<8x8xf32>
    %c0_30 = arith.constant 0 : index
    %c0_31 = arith.constant 0 : index
    %47 = vector.load %arg8[%c0_30, %c0_31] : memref<8x8xf32, #tpu.memory_space<vmem>>, vector<8x8xf32>
    tpu.vector_store %arg8[%c0_30, %c0_31], %46 {strides = array<i32>} : memref<8x8xf32, #tpu.memory_space<vmem>>, vector<8x8xf32>,
    return
  }
  func.func @transform_0(%arg0: i32) -> (i32, i32) {
    %c0_i32 = arith.constant 0 : i32
    %c0_i32_0 = arith.constant 0 : i32
    return %arg0, %c0_i32 : i32, i32
  }
  func.func @transform_1(%arg0: i32) -> (i32, i32) {
    %c0_i32 = arith.constant 0 : i32
    %c0_i32_0 = arith.constant 0 : i32
    %c0_i32_1 = arith.constant 0 : i32
    return %c0_i32, %c0_i32_0 : i32, i32
  }
  func.func @transform_2(%arg0: i32) -> (i32, i32) {
    %c0_i32 = arith.constant 0 : i32
    %c0_i32_0 = arith.constant 0 : i32
    %c0_i32_1 = arith.constant 0 : i32
    return %c0_i32, %c0_i32_0 : i32, i32
  }
  func.func @transform_3(%arg0: i32) -> (i32, i32, i32) {
    %c0_i32 = arith.constant 0 : i32
    %c0_i32_0 = arith.constant 0 : i32
    %c0_i32_1 = arith.constant 0 : i32
    %c0_i32_2 = arith.constant 0 : i32
    return %c0_i32, %c0_i32_0, %c0_i32_1 : i32, i32, i32
  }
  func.func @transform_4(%arg0: i32) -> (i32, i32, i32) {
    %c0_i32 = arith.constant 0 : i32
    %c0_i32_0 = arith.constant 0 : i32
    %c0_i32_1 = arith.constant 0 : i32
    %c0_i32_2 = arith.constant 0 : i32
    return %c0_i32, %c0_i32_0, %c0_i32_1 : i32, i32, i32
  }
  func.func @transform_5(%arg0: i32) -> (i32, i32) {
    %c0_i32 = arith.constant 0 : i32
    %c0_i32_0 = arith.constant 0 : i32
    %c0_i32_1 = arith.constant 0 : i32
    return %c0_i32, %c0_i32_0 : i32, i32
  }
  func.func @transform_6(%arg0: i32) -> (i32, i32) {
    %c0_i32 = arith.constant 0 : i32
    %c0_i32_0 = arith.constant 0 : i32
    %c0_i32_1 = arith.constant 0 : i32
    return %c0_i32, %c0_i32_0 : i32, i32
  }
  func.func @transform_7(%arg0: i32) -> (i32, i32) {
    %c0_i32 = arith.constant 0 : i32
    %c0_i32_0 = arith.constant 0 : i32
    return %arg0, %c0_i32 : i32, i32
  }
}

</mosaic_0001>

<llo_original>
// kernel: tpu_custom_call.1
$region0: #{tpu_custom_call.1}
  #allocation0 [shape = 'u32[]', space=smem, size = 0x4, offset = 0x4, fixed_abs, tag = 'smem constant byte address 0x4 - core index']
  #allocation1 [shape = 'u32[144,128]{1,0:T(1,128)}', space=vmem, size = 0x12000, scoped, tag = 'internal scratch']
  %s0 = inlined_call_operand.vmem [shape: f32[8,45], index: 0, kind: input, shape index: {}]
  %s1 = inlined_call_operand.vmem [shape: f32[45,128], index: 1, kind: input, shape index: {}]
  %s2 = inlined_call_operand.vmem [shape: f32[1,128], index: 2, kind: input, shape index: {}]
  %s3 = inlined_call_operand.hbm [shape: f32[2,128,128], index: 3, kind: input, shape index: {}]
  %s4 = inlined_call_operand.vmem [shape: f32[2,1,128], index: 4, kind: input, shape index: {}]
  %s5 = inlined_call_operand.vmem [shape: f32[128,8], index: 5, kind: input, shape index: {}]
  %s6 = inlined_call_operand.vmem [shape: f32[1,8], index: 6, kind: input, shape index: {}]
  %s7 = inlined_call_operand.hbm [shape: f32[8,8], index: 7, kind: output, shape index: {}]
  %s8 = sld [smem:[#allocation0]]
  $region42: #{tpu_custom_call.1} parent=0
    _
  %s10 = ssub.s32 1, %s8
  %s11 = scalar_select 0, %s10, %s8
  $region1: #{tpu_custom_call.1} parent=0
    #allocation2 [shape = 'u8[131072]{0}', space=vmem, size = 0x20000, scoped, tag = 'input window, operand 3, single buffered']
    #allocation3 [shape = 's32[1]{0}', space=sflag, size = 0x4, scoped, tag = 'scoped memory for tpu_custom_call.1']
    #allocation4 [shape = 's32[1]{0}', space=sflag, size = 0x4, scoped, tag = 'scoped memory for tpu_custom_call.1']
    #allocation5 [shape = 'u8[4096]{0}', space=vmem, size = 0x1000, scoped, tag = 'output window, operand 0, single buffered']
    %12 = vsyncpa [#allocation3], 0
    %13 = vsyncpa [#allocation4], 0
    // Predicated region
    $region2: #{tpu_custom_call.1} parent=1 // pred_check
      _
    $region3: #{tpu_custom_call.1} parent=1 // pred_check_branch
      %15 = sbr.rel (0) target = $region5
    $region4: #{tpu_custom_call.1} parent=1 // pred_region
      _
    $region5: #{tpu_custom_call.1} parent=1 // pred_fallthru
      _
    // Predicated region
    $region6: #{tpu_custom_call.1} parent=1 // pred_check
      _
    $region7: #{tpu_custom_call.1} parent=1 // pred_check_branch
      %17 = sbr.rel (0) target = $region9
    $region8: #{tpu_custom_call.1} parent=1 // pred_region
      _
    $region9: #{tpu_custom_call.1} parent=1 // pred_fallthru
      _
    // Predicated region
    $region10: #{tpu_custom_call.1} parent=1 // pred_check
      _
    $region11: #{tpu_custom_call.1} parent=1 // pred_check_branch
      %19 = sbr.rel (0) target = $region13
    $region12: #{tpu_custom_call.1} parent=1 // pred_region
      _
    $region13: #{tpu_custom_call.1} parent=1 // pred_fallthru
      _
    // Predicated region
    $region14: #{tpu_custom_call.1} parent=1 // pred_check
      _
    $region15: #{tpu_custom_call.1} parent=1 // pred_check_branch
      %21 = sbr.rel (0) target = $region17
    $region16: #{tpu_custom_call.1} parent=1 // pred_region
      %s23 = ssub.s32 4096, 4096
      %24 = vsyncadd [#allocation3], %s23
      %s25 = sshll.u32 [#allocation2], 4
      %s26 = int_to_ptr.vmem [resolvable:$true] %s25
      %31 = dma.hbm_to_vmem [thread:$0]  %s3, 4096, %s26, [#allocation3], 128, 128, 8
    $region17: #{tpu_custom_call.1} parent=1 // pred_fallthru
      _
    // Predicated region
    $region18: #{tpu_custom_call.1} parent=1 // pred_check
      _
    $region19: #{tpu_custom_call.1} parent=1 // pred_check_branch
      %33 = sbr.rel (0) target = $region21
    $region20: #{tpu_custom_call.1} parent=1 // pred_region
      _
    $region21: #{tpu_custom_call.1} parent=1 // pred_fallthru
      _
    // Predicated region
    $region22: #{tpu_custom_call.1} parent=1 // pred_check
      _
    $region23: #{tpu_custom_call.1} parent=1 // pred_check_branch
      %35 = sbr.rel (0) target = $region25
    $region24: #{tpu_custom_call.1} parent=1 // pred_region
      _
    $region25: #{tpu_custom_call.1} parent=1 // pred_fallthru
      _
    // Predicated region
    $region26: #{tpu_custom_call.1} parent=1 // pred_check
      _
    $region27: #{tpu_custom_call.1} parent=1 // pred_check_branch
      %37 = sbr.rel (0) target = $region29
    $region28: #{tpu_custom_call.1} parent=1 // pred_region
      _
    $region29: #{tpu_custom_call.1} parent=1 // pred_fallthru
      _
    // Predicated region
    $region30: #{tpu_custom_call.1} parent=1 // pred_check
      _
    $region31: #{tpu_custom_call.1} parent=1 // pred_check_branch
      %39 = sbr.rel (0) target = $region33
    $region32: #{tpu_custom_call.1} parent=1 // pred_region
      %40 = dma.done [#allocation3], 4096
    $region33: #{tpu_custom_call.1} parent=1 // pred_fallthru
      _
    %v41 = vld [vmem:[%s0] sm:$0xff]
    %v42 = vld [vmem:[%s1] sm:$0xff]
    %v43 = vld [vmem:[%s1 + $0x8] sm:$0xff]
    %v44 = vld [vmem:[%s1 + $0x10] sm:$0xff]
    %v45 = vld [vmem:[%s1 + $0x18] sm:$0xff]
    %v46 = vld [vmem:[%s1 + $0x20] sm:$0xff]
    %v47 = vld [vmem:[%s1 + $0x28] sm:$0x1f]
    %v48 = vld [vmem:[%s2] sm:$0x1]
    %v50 = vlaneseq
    %v51 = vshrl.u32 %v50, 7
    %v52 = vsub.s32 0, %v51
    %v53 = vrot.slane %v48, %v52
    %vm55 = vcmask 367616
    %v57 = vsel %vm55, %v41, 0
    %vm59 = vcmask 1044480
    %v61 = vsel %vm59, %v47, 0
    %63 = vmatprep.subr.mxu0 0.0
    %64 = vmatpush1.msra.mxu0 %v42
    %65 = vmatprep.subr.mxu0 0.0
    %66 = vmatpush1.msra.mxu0 %v43
    %67 = vmatprep.subr.mxu0 0.0
    %68 = vmatpush1.msra.mxu0 %v44
    %69 = vmatprep.subr.mxu0 0.0
    %70 = vmatpush1.msra.mxu0 %v45
    %71 = vmatprep.subr.mxu0 0.0
    %72 = vmatpush1.msra.mxu0 %v46
    %73 = vmatprep.subr.mxu0 0.0
    %74 = vmatpush1.msra.mxu0 %v61
    %75 = vmatprep.subr.mxu0 0.0
    %76 = vmatpush1.msra.mxu0 0.0
    %77 = vmatprep.subr.mxu0 0.0
    %78 = vmatpush1.msra.mxu0 0.0
    %79 = vmatprep.subr.mxu0 0.0
    %80 = vmatpush1.msra.mxu0 0.0
    %81 = vmatprep.subr.mxu0 0.0
    %82 = vmatpush1.msra.mxu0 0.0
    %83 = vmatprep.subr.mxu0 0.0
    %84 = vmatpush1.msra.mxu0 0.0
    %85 = vmatprep.subr.mxu0 0.0
    %86 = vmatpush1.msra.mxu0 0.0
    %87 = vmatprep.subr.mxu0 0.0
    %88 = vmatpush1.msra.mxu0 0.0
    %89 = vmatprep.subr.mxu0 0.0
    %90 = vmatpush1.msra.mxu0 0.0
    %91 = vmatprep.subr.mxu0 0.0
    %92 = vmatpush1.msra.mxu0 0.0
    %93 = vmatprep.subr.mxu0 0.0
    %94 = vmatpush1.msra.mxu0 0.0
    %95 = vmatprep.subr.mxu0 0.0
    %96 = vmatpush1.msra.mxu0 0.0
    %97 = vmatprep.subr.mxu0 0.0
    %98 = vmatpush1.msra.mxu0 0.0
    %99 = vmatprep.subr.mxu0 0.0
    %100 = vmatpush1.msra.mxu0 0.0
    %101 = vmatprep.subr.mxu0 0.0
    %102 = vmatpush1.msra.mxu0 0.0
    %103 = vmatprep.subr.mxu0 0.0
    %104 = vmatpush1.msra.mxu0 0.0
    %105 = vmatprep.subr.mxu0 0.0
    %106 = vmatpush1.msra.mxu0 0.0
    %107 = vmatprep.subr.mxu0 0.0
    %108 = vmatpush1.msra.mxu0 0.0
    %109 = vmatprep.subr.mxu0 0.0
    %110 = vmatpush1.msra.mxu0 0.0
    %111 = vmatprep.subr.mxu0 0.0
    %112 = vmatpush1.msra.mxu0 0.0
    %113 = vmatprep.subr.mxu0 0.0
    %114 = vmatpush1.msra.mxu0 0.0
    %115 = vmatprep.subr.mxu0 0.0
    %116 = vmatpush1.msra.mxu0 0.0
    %117 = vmatprep.subr.mxu0 0.0
    %118 = vmatpush1.msra.mxu0 0.0
    %119 = vmatprep.subr.mxu0 0.0
    %120 = vmatpush1.msra.mxu0 0.0
    %121 = vmatprep.subr.mxu0 0.0
    %122 = vmatpush1.msra.mxu0 0.0
    %123 = vmatprep.subr.mxu0 0.0
    %124 = vmatpush1.msra.mxu0 0.0
    %125 = vmatprep.subr.mxu0 0.0
    %126 = vmatpush1.msra.mxu0 0.0
    %127 = vmatprep.mubr.f32.mxu0 0.0
    %128 = vmatmul.mubr.f32.gmra.mrb[0].mxu0 %v57
    %v129 = vpop.f32.mrb[0].mxu0
    %v130 = vadd.f32 %v53, %v129
    %v131 = vpop.f32.mrb[0].mxu0
    %132 = vdwg.mxu0
    %v133 = vmax.f32 %v130, 0.0
    %v134 = vld [vmem:[#allocation2] sm:$0xff]
    %v135 = vld [vmem:[#allocation2 + $0x8] sm:$0xff]
    %v136 = vld [vmem:[#allocation2 + $0x10] sm:$0xff]
    %v137 = vld [vmem:[#allocation2 + $0x18] sm:$0xff]
    %v138 = vld [vmem:[#allocation2 + $0x20] sm:$0xff]
    %v139 = vld [vmem:[#allocation2 + $0x28] sm:$0xff]
    %v140 = vld [vmem:[#allocation2 + $0x30] sm:$0xff]
    %v141 = vld [vmem:[#allocation2 + $0x38] sm:$0xff]
    %v142 = vld [vmem:[#allocation2 + $0x40] sm:$0xff]
    %v143 = vld [vmem:[#allocation2 + $0x48] sm:$0xff]
    %v144 = vld [vmem:[#allocation2 + $0x50] sm:$0xff]
    %v145 = vld [vmem:[#allocation2 + $0x58] sm:$0xff]
    %v146 = vld [vmem:[#allocation2 + $0x60] sm:$0xff]
    %v147 = vld [vmem:[#allocation2 + $0x68] sm:$0xff]
    %v148 = vld [vmem:[#allocation2 + $0x70] sm:$0xff]
    %v149 = vld [vmem:[#allocation2 + $0x78] sm:$0xff]
    %v150 = vld [vmem:[%s4] sm:$0x1]
    %v152 = vlaneseq
    %v153 = vshrl.u32 %v152, 7
    %v154 = vsub.s32 0, %v153
    %v155 = vrot.slane %v150, %v154
    %157 = vmatprep.subr.mxu0 0.0
    %158 = vmatpush1.msra.mxu0 %v134
    %159 = vmatprep.subr.mxu0 0.0
    %160 = vmatpush1.msra.mxu0 %v135
    %161 = vmatprep.subr.mxu0 0.0
    %162 = vmatpush1.msra.mxu0 %v136
    %163 = vmatprep.subr.mxu0 0.0
    %164 = vmatpush1.msra.mxu0 %v137
    %165 = vmatprep.subr.mxu0 0.0
    %166 = vmatpush1.msra.mxu0 %v138
    %167 = vmatprep.subr.mxu0 0.0
    %168 = vmatpush1.msra.mxu0 %v139
    %169 = vmatprep.subr.mxu0 0.0
    %170 = vmatpush1.msra.mxu0 %v140
    %171 = vmatprep.subr.mxu0 0.0
    %172 = vmatpush1.msra.mxu0 %v141
    %173 = vmatprep.subr.mxu0 0.0
    %174 = vmatpush1.msra.mxu0 %v142
    %175 = vmatprep.subr.mxu0 0.0
    %176 = vmatpush1.msra.mxu0 %v143
    %177 = vmatprep.subr.mxu0 0.0
    %178 = vmatpush1.msra.mxu0 %v144
    %179 = vmatprep.subr.mxu0 0.0
    %180 = vmatpush1.msra.mxu0 %v145
    %181 = vmatprep.subr.mxu0 0.0
    %182 = vmatpush1.msra.mxu0 %v146
    %183 = vmatprep.subr.mxu0 0.0
    %184 = vmatpush1.msra.mxu0 %v147
    %185 = vmatprep.subr.mxu0 0.0
    %186 = vmatpush1.msra.mxu0 %v148
    %187 = vmatprep.subr.mxu0 0.0
    %188 = vmatpush1.msra.mxu0 %v149
    %189 = vmatprep.subr.mxu0 0.0
    %190 = vmatpush1.msra.mxu0 0.0
    %191 = vmatprep.subr.mxu0 0.0
    %192 = vmatpush1.msra.mxu0 0.0
    %193 = vmatprep.subr.mxu0 0.0
    %194 = vmatpush1.msra.mxu0 0.0
    %195 = vmatprep.subr.mxu0 0.0
    %196 = vmatpush1.msra.mxu0 0.0
    %197 = vmatprep.subr.mxu0 0.0
    %198 = vmatpush1.msra.mxu0 0.0
    %199 = vmatprep.subr.mxu0 0.0
    %200 = vmatpush1.msra.mxu0 0.0
    %201 = vmatprep.subr.mxu0 0.0
    %202 = vmatpush1.msra.mxu0 0.0
    %203 = vmatprep.subr.mxu0 0.0
    %204 = vmatpush1.msra.mxu0 0.0
    %205 = vmatprep.subr.mxu0 0.0
    %206 = vmatpush1.msra.mxu0 0.0
    %207 = vmatprep.subr.mxu0 0.0
    %208 = vmatpush1.msra.mxu0 0.0
    %209 = vmatprep.subr.mxu0 0.0
    %210 = vmatpush1.msra.mxu0 0.0
    %211 = vmatprep.subr.mxu0 0.0
    %212 = vmatpush1.msra.mxu0 0.0
    %213 = vmatprep.subr.mxu0 0.0
    %214 = vmatpush1.msra.mxu0 0.0
    %215 = vmatprep.subr.mxu0 0.0
    %216 = vmatpush1.msra.mxu0 0.0
    %217 = vmatprep.subr.mxu0 0.0
    %218 = vmatpush1.msra.mxu0 0.0
    %219 = vmatprep.subr.mxu0 0.0
    %220 = vmatpush1.msra.mxu0 0.0
    %221 = vmatprep.mubr.f32.mxu0 0.0
    %222 = vmatmul.mubr.f32.gmra.mrb[0].mxu0 %v133
    %v223 = vpop.f32.mrb[0].mxu0
    %v224 = vadd.f32 %v155, %v223
    %v225 = vpop.f32.mrb[0].mxu0
    %226 = vdwg.mxu0
    %v227 = vmax.f32 %v224, 0.0
    %s228 = scalar_lea.vmem [#allocation2], 128
    %v229 = vld [vmem:[%s228] sm:$0xff]
    %v230 = vld [vmem:[%s228 + $0x8] sm:$0xff]
    %v231 = vld [vmem:[%s228 + $0x10] sm:$0xff]
    %v232 = vld [vmem:[%s228 + $0x18] sm:$0xff]
    %v233 = vld [vmem:[%s228 + $0x20] sm:$0xff]
    %v234 = vld [vmem:[%s228 + $0x28] sm:$0xff]
    %v235 = vld [vmem:[%s228 + $0x30] sm:$0xff]
    %v236 = vld [vmem:[%s228 + $0x38] sm:$0xff]
    %v237 = vld [vmem:[%s228 + $0x40] sm:$0xff]
    %v238 = vld [vmem:[%s228 + $0x48] sm:$0xff]
    %v239 = vld [vmem:[%s228 + $0x50] sm:$0xff]
    %v240 = vld [vmem:[%s228 + $0x58] sm:$0xff]
    %v241 = vld [vmem:[%s228 + $0x60] sm:$0xff]
    %v242 = vld [vmem:[%s228 + $0x68] sm:$0xff]
    %v243 = vld [vmem:[%s228 + $0x70] sm:$0xff]
    %v244 = vld [vmem:[%s228 + $0x78] sm:$0xff]
    %s245 = scalar_lea.vmem %s4, 1
    %v246 = vld [vmem:[%s245] sm:$0x1]
    %v248 = vlaneseq
    %v249 = vshrl.u32 %v248, 7
    %v250 = vsub.s32 0, %v249
    %v251 = vrot.slane %v246, %v250
    %253 = vmatprep.subr.mxu0 0.0
    %254 = vmatpush1.msra.mxu0 %v229
    %255 = vmatprep.subr.mxu0 0.0
    %256 = vmatpush1.msra.mxu0 %v230
    %257 = vmatprep.subr.mxu0 0.0
    %258 = vmatpush1.msra.mxu0 %v231
    %259 = vmatprep.subr.mxu0 0.0
    %260 = vmatpush1.msra.mxu0 %v232
    %261 = vmatprep.subr.mxu0 0.0
    %262 = vmatpush1.msra.mxu0 %v233
    %263 = vmatprep.subr.mxu0 0.0
    %264 = vmatpush1.msra.mxu0 %v234
    %265 = vmatprep.subr.mxu0 0.0
    %266 = vmatpush1.msra.mxu0 %v235
    %267 = vmatprep.subr.mxu0 0.0
    %268 = vmatpush1.msra.mxu0 %v236
    %269 = vmatprep.subr.mxu0 0.0
    %270 = vmatpush1.msra.mxu0 %v237
    %271 = vmatprep.subr.mxu0 0.0
    %272 = vmatpush1.msra.mxu0 %v238
    %273 = vmatprep.subr.mxu0 0.0
    %274 = vmatpush1.msra.mxu0 %v239
    %275 = vmatprep.subr.mxu0 0.0
    %276 = vmatpush1.msra.mxu0 %v240
    %277 = vmatprep.subr.mxu0 0.0
    %278 = vmatpush1.msra.mxu0 %v241
    %279 = vmatprep.subr.mxu0 0.0
    %280 = vmatpush1.msra.mxu0 %v242
    %281 = vmatprep.subr.mxu0 0.0
    %282 = vmatpush1.msra.mxu0 %v243
    %283 = vmatprep.subr.mxu0 0.0
    %284 = vmatpush1.msra.mxu0 %v244
    %285 = vmatprep.subr.mxu0 0.0
    %286 = vmatpush1.msra.mxu0 0.0
    %287 = vmatprep.subr.mxu0 0.0
    %288 = vmatpush1.msra.mxu0 0.0
    %289 = vmatprep.subr.mxu0 0.0
    %290 = vmatpush1.msra.mxu0 0.0
    %291 = vmatprep.subr.mxu0 0.0
    %292 = vmatpush1.msra.mxu0 0.0
    %293 = vmatprep.subr.mxu0 0.0
    %294 = vmatpush1.msra.mxu0 0.0
    %295 = vmatprep.subr.mxu0 0.0
    %296 = vmatpush1.msra.mxu0 0.0
    %297 = vmatprep.subr.mxu0 0.0
    %298 = vmatpush1.msra.mxu0 0.0
    %299 = vmatprep.subr.mxu0 0.0
    %300 = vmatpush1.msra.mxu0 0.0
    %301 = vmatprep.subr.mxu0 0.0
    %302 = vmatpush1.msra.mxu0 0.0
    %303 = vmatprep.subr.mxu0 0.0
    %304 = vmatpush1.msra.mxu0 0.0
    %305 = vmatprep.subr.mxu0 0.0
    %306 = vmatpush1.msra.mxu0 0.0
    %307 = vmatprep.subr.mxu0 0.0
    %308 = vmatpush1.msra.mxu0 0.0
    %309 = vmatprep.subr.mxu0 0.0
    %310 = vmatpush1.msra.mxu0 0.0
    %311 = vmatprep.subr.mxu0 0.0
    %312 = vmatpush1.msra.mxu0 0.0
    %313 = vmatprep.subr.mxu0 0.0
    %314 = vmatpush1.msra.mxu0 0.0
    %315 = vmatprep.subr.mxu0 0.0
    %316 = vmatpush1.msra.mxu0 0.0
    %317 = vmatprep.mubr.f32.mxu0 0.0
    %318 = vmatmul.mubr.f32.gmra.mrb[0].mxu0 %v227
    %v319 = vpop.f32.mrb[0].mxu0
    %v320 = vadd.f32 %v251, %v319
    %v321 = vpop.f32.mrb[0].mxu0
    %322 = vdwg.mxu0
    %v323 = vmax.f32 %v320, 0.0
    %v324 = vld [vmem:[%s5] sm:$0xff]
    %v325 = vld [vmem:[%s5 + $0x8] sm:$0xff]
    %v326 = vld [vmem:[%s5 + $0x10] sm:$0xff]
    %v327 = vld [vmem:[%s5 + $0x18] sm:$0xff]
    %v328 = vld [vmem:[%s5 + $0x20] sm:$0xff]
    %v329 = vld [vmem:[%s5 + $0x28] sm:$0xff]
    %v330 = vld [vmem:[%s5 + $0x30] sm:$0xff]
    %v331 = vld [vmem:[%s5 + $0x38] sm:$0xff]
    %v332 = vld [vmem:[%s5 + $0x40] sm:$0xff]
    %v333 = vld [vmem:[%s5 + $0x48] sm:$0xff]
    %v334 = vld [vmem:[%s5 + $0x50] sm:$0xff]
    %v335 = vld [vmem:[%s5 + $0x58] sm:$0xff]
    %v336 = vld [vmem:[%s5 + $0x60] sm:$0xff]
    %v337 = vld [vmem:[%s5 + $0x68] sm:$0xff]
    %v338 = vld [vmem:[%s5 + $0x70] sm:$0xff]
    %v339 = vld [vmem:[%s5 + $0x78] sm:$0xff]
    %v340 = vld [vmem:[%s6] sm:$0x1]
    %v342 = vlaneseq
    %v343 = vshrl.u32 %v342, 7
    %v344 = vsub.s32 0, %v343
    %v345 = vrot.slane %v340, %v344
    %347 = vmatprep.subr.mxu0 0.0
    %348 = vmatpush1.msra.mxu0 %v324
    %349 = vmatprep.subr.mxu0 0.0
    %350 = vmatpush1.msra.mxu0 %v325
    %351 = vmatprep.subr.mxu0 0.0
    %352 = vmatpush1.msra.mxu0 %v326
    %353 = vmatprep.subr.mxu0 0.0
    %354 = vmatpush1.msra.mxu0 %v327
    %355 = vmatprep.subr.mxu0 0.0
    %356 = vmatpush1.msra.mxu0 %v328
    %357 = vmatprep.subr.mxu0 0.0
    %358 = vmatpush1.msra.mxu0 %v329
    %359 = vmatprep.subr.mxu0 0.0
    %360 = vmatpush1.msra.mxu0 %v330
    %361 = vmatprep.subr.mxu0 0.0
    %362 = vmatpush1.msra.mxu0 %v331
    %363 = vmatprep.subr.mxu0 0.0
    %364 = vmatpush1.msra.mxu0 %v332
    %365 = vmatprep.subr.mxu0 0.0
    %366 = vmatpush1.msra.mxu0 %v333
    %367 = vmatprep.subr.mxu0 0.0
    %368 = vmatpush1.msra.mxu0 %v334
    %369 = vmatprep.subr.mxu0 0.0
    %370 = vmatpush1.msra.mxu0 %v335
    %371 = vmatprep.subr.mxu0 0.0
    %372 = vmatpush1.msra.mxu0 %v336
    %373 = vmatprep.subr.mxu0 0.0
    %374 = vmatpush1.msra.mxu0 %v337
    %375 = vmatprep.subr.mxu0 0.0
    %376 = vmatpush1.msra.mxu0 %v338
    %377 = vmatprep.subr.mxu0 0.0
    %378 = vmatpush1.msra.mxu0 %v339
    %379 = vmatprep.subr.mxu0 0.0
    %380 = vmatpush1.msra.mxu0 0.0
    %381 = vmatprep.subr.mxu0 0.0
    %382 = vmatpush1.msra.mxu0 0.0
    %383 = vmatprep.subr.mxu0 0.0
    %384 = vmatpush1.msra.mxu0 0.0
    %385 = vmatprep.subr.mxu0 0.0
    %386 = vmatpush1.msra.mxu0 0.0
    %387 = vmatprep.subr.mxu0 0.0
    %388 = vmatpush1.msra.mxu0 0.0
    %389 = vmatprep.subr.mxu0 0.0
    %390 = vmatpush1.msra.mxu0 0.0
    %391 = vmatprep.subr.mxu0 0.0
    %392 = vmatpush1.msra.mxu0 0.0
    %393 = vmatprep.subr.mxu0 0.0
    %394 = vmatpush1.msra.mxu0 0.0
    %395 = vmatprep.subr.mxu0 0.0
    %396 = vmatpush1.msra.mxu0 0.0
    %397 = vmatprep.subr.mxu0 0.0
    %398 = vmatpush1.msra.mxu0 0.0
    %399 = vmatprep.subr.mxu0 0.0
    %400 = vmatpush1.msra.mxu0 0.0
    %401 = vmatprep.subr.mxu0 0.0
    %402 = vmatpush1.msra.mxu0 0.0
    %403 = vmatprep.subr.mxu0 0.0
    %404 = vmatpush1.msra.mxu0 0.0
    %405 = vmatprep.subr.mxu0 0.0
    %406 = vmatpush1.msra.mxu0 0.0
    %407 = vmatprep.subr.mxu0 0.0
    %408 = vmatpush1.msra.mxu0 0.0
    %409 = vmatprep.subr.mxu0 0.0
    %410 = vmatpush1.msra.mxu0 0.0
    %411 = vmatprep.mubr.f32.mxu0 0.0
    %412 = vmatmul.mubr.f32.gmra.mrb[0].mxu0 %v323
    %v413 = vpop.f32.mrb[0].mxu0
    %v414 = vadd.f32 %v345, %v413
    %v415 = vpop.f32.mrb[0].mxu0
    %416 = vdwg.mxu0
    %v417 = vlaneseq
    %v418 = vand.u32 %v417, 127
    %vm419 = vcmp.lt.s32.totalorder %v418, 3
    %v420 = vsel %vm419, %v414, -1e+30
    %vm421 = vcmask 64512
    %v422 = vsel %vm421, %v420, -inf
    %423 = vmax.xlane.f32.xlu0 %v422
    %v424 = vpop.xlane.xlu0 %423
    %v425 = vsub.f32 %v414, %v424
    %v426 = vmul.f32 %v425, 1.442695
    %v427 = vpow.pop %v426
    %v428 = vsel %vm419, %v427, 0.0
    %v429 = vsel %vm421, %v428, 0.0
    %430 = vadd.xlane.f32.xlu0 %v429
    %v431 = vpop.xlane.xlu0 %430
    %v432 = vrcp.pop %v431
    %v433 = vmul.f32 %v428, %v432
    %434 = vst.msk [vmem:[#allocation5] sm:$0xff] %vm421, %v433
    // Predicated region
    $region34: #{tpu_custom_call.1} parent=1 // pred_check
      _
    $region35: #{tpu_custom_call.1} parent=1 // pred_check_branch
      %436 = sbr.rel (0) target = $region37
    $region36: #{tpu_custom_call.1} parent=1 // pred_region
      %s438 = ssub.s32 128, 128
      %439 = vsyncadd [#allocation4], %s438
      %s441 = sshll.u32 [#allocation5], 4
      %s442 = int_to_ptr.vmem [resolvable:$true] %s441
      %444 = dma.vmem_to_hbm [thread:$0]  %s442, 128, %s7, [#allocation4]
    $region37: #{tpu_custom_call.1} parent=1 // pred_fallthru
      _
    // Predicated region
    $region38: #{tpu_custom_call.1} parent=1 // pred_check
      _
    $region39: #{tpu_custom_call.1} parent=1 // pred_check_branch
      %446 = sbr.rel (0) target = $region41
    $region40: #{tpu_custom_call.1} parent=1 // pred_region
      %447 = dma.done [#allocation4], 128
    $region41: #{tpu_custom_call.1} parent=1 // pred_fallthru
      _
    %448 = vsyncpa [#allocation3], 1
    %449 = vsyncpa [#allocation4], 1

</llo_original>
